<compile_context>
chip_gen: v5e
topology: v5e:2x2
jax: 0.10.0
libtpu: 0.0.40
codegen_flags: <defaults>
</compile_context>

<pallas_src>
import jax
import jax.numpy as jnp
import numpy as np
from jax import lax
from jax.experimental import pallas as pl
from jax.experimental.pallas import tpu as pltpu

GAMMA = 6


def _round_up(x, m):
    return ((x + m - 1) // m) * m


def _choose_tn(N, K, HW, la_budget_bytes=6 << 20):
    """Frames per grid step: multiple of 8, sized to a per-block VMEM budget."""
    per_frame_bytes = (K + 1) * HW * 4          # log-alpha + gt streams
    tn = max(8, (la_budget_bytes // per_frame_bytes) // 8 * 8)
    tn = min(tn, _round_up(N, 8))
    return int(tn)


def _focal_kernel(flags_ref, la_ref, gt_ref, w_ref, out_ref):
    """Focal loss over a block of TN frames.

    flags_ref : SMEM i32[G]            (scalar prefetch: block has any nonzero label)
    la_ref    : VMEM f32[TN, K, HW]    (log alpha, lane-dense spatial axis)
    gt_ref    : VMEM i32[TN, HW]       (gt class ids)
    w_ref     : VMEM f32[TN, 1]        (per-frame weight = label != 0)
    out_ref   : VMEM f32[1, 1, 128]    (per-block partial sum, broadcast over lanes)
    """
    g = pl.program_id(0)
    has_work = flags_ref[g] != 0

    @pl.when(jnp.logical_not(has_work))
    def _():
        out_ref[...] = jnp.zeros_like(out_ref)

    @pl.when(has_work)
    def _():
        la = la_ref[...]                      # (TN, K, HW) f32
        gt = gt_ref[...]                      # (TN, HW)   i32
        w = w_ref[...]                        # (TN, 1)    f32

        # Gather over the class axis: compare + select + sum (no cast / mul).
        k_iota = lax.broadcasted_iota(jnp.int32, la.shape, 1)       # (TN, K, HW)
        sel = jnp.where(k_iota == gt[:, None, :], la, 0.0)
        logpt = jnp.sum(sel, axis=1)                                # (TN, HW)

        pt = jnp.exp(logpt)
        q = 1.0 - pt
        q2 = q * q
        q6 = q2 * q2 * q2                                           # (1 - pt)^6
        loss = (q6 * logpt) * w                                     # (TN, HW), weighted

        block_sum = -jnp.sum(loss)                                  # one reduce / block
        out_ref[...] = jnp.broadcast_to(
            block_sum.astype(out_ref.dtype), out_ref.shape)


def focal_loss_semi(log_alpha, segmentations, label):
    """log_alpha: f32[B,S,K,H,W,1]; segmentations: int[B,S,H,W]; label: int[B,S]."""
    B, S, K, H, W, _ = log_alpha.shape
    N = B * S
    HW = H * W

    # Free (contiguous) reshapes to a lane-dense layout.
    la = log_alpha.reshape(N, K, HW).astype(jnp.float32)
    gt = segmentations.reshape(N, HW).astype(jnp.int32)
    w = (label.reshape(N) != 0).astype(jnp.float32)

    TN = _choose_tn(N, K, HW)
    N_pad = _round_up(N, TN)
    if N_pad != N:
        la = jnp.pad(la, ((0, N_pad - N), (0, 0), (0, 0)))
        gt = jnp.pad(gt, ((0, N_pad - N), (0, 0)))
        w = jnp.pad(w, ((0, N_pad - N),))
    G = N_pad // TN

    w_col = w.reshape(N_pad, 1)
    flags = (jnp.sum(w.reshape(G, TN), axis=1) > 0).astype(jnp.int32)

    partials = pl.pallas_call(
        _focal_kernel,
        out_shape=jax.ShapeDtypeStruct((G, 1, 128), jnp.float32),
        grid_spec=pltpu.PrefetchScalarGridSpec(
            num_scalar_prefetch=1,
            grid=(G,),
            in_specs=[
                pl.BlockSpec((TN, K, HW), lambda g, flags: (g, 0, 0)),
                pl.BlockSpec((TN, HW), lambda g, flags: (g, 0)),
                pl.BlockSpec((TN, 1), lambda g, flags: (g, 0)),
            ],
            out_specs=pl.BlockSpec((1, 1, 128), lambda g, flags: (g, 0, 0)),
        ),
        compiler_params=pltpu.CompilerParams(
            dimension_semantics=("parallel",),
            vmem_limit_bytes=32 << 20,
        ),
    )(flags, la, gt, w_col)

    loss_sum = jnp.sum(partials[:, 0, 0])
    # Matches torch semantics: divide by count of nonzero labels.
    # (Precondition, as in the PyTorch module: at least one nonzero label.)
    cnt = jnp.sum(w)
    return (loss_sum / cnt).reshape(1)


def semi_loss(model_outputs, batch):
    """model_outputs: tuple, index 3 is log_alpha_mask [B,S,K,H,W,1].
    batch: (video, boxes, segmentations, gt_flow, padding_mask, mask, label)."""
    video, boxes, segmentations, gt_flow, padding_mask, mask, label = batch
    focal = focal_loss_semi(model_outputs[3], segmentations, label)
    recon = jnp.asarray(0)  # SemiLoss hard-codes recon = 0
    loss = focal
    return loss, recon, focal


def _reference_focal(log_alpha, segmentations, label, gamma=GAMMA):
    """Pure-JAX reference mirroring FocalLoss_semi."""
    B, S, K, H, W, _ = log_alpha.shape
    la = jnp.squeeze(log_alpha, 5).reshape(-1, K, H, W).astype(jnp.float32)
    gt = segmentations.reshape(-1, H, W)
    lbl = label.reshape(-1)
    onehot = jax.nn.one_hot(gt, K, axis=1, dtype=jnp.float32)       # (N,K,H,W)
    logpt = jnp.sum(la * onehot, axis=1)                            # (N,H,W)
    pt = jnp.exp(logpt)
    per_frame = jnp.sum(-((1.0 - pt) ** gamma) * logpt, axis=(1, 2))
    w = (lbl != 0).astype(jnp.float32)
    return (jnp.sum(per_frame * w) / jnp.sum(w)).reshape(1)


if __name__ == "__main__":
    key = jax.random.PRNGKey(0)
    B, S, K, H, W = 2, 4, 4, 16, 16

    k1, k2, k3, k4 = jax.random.split(key, 4)
    # log_alpha_mask: log-softmax over the slot/class axis K (realistic log-probs).
    logits = jax.random.normal(k1, (B, S, K, H, W, 1), dtype=jnp.float32)
    log_alpha_mask = jax.nn.log_softmax(logits, axis=2)

    segmentations = jax.random.randint(k2, (B, S, H, W), 0, K, dtype=jnp.int32)
    # Labels: mix of zero (skipped) and nonzero frames; guaranteed >= 1 nonzero.
    label = jax.random.randint(k3, (B, S), 0, 2, dtype=jnp.int32)
    label = label.at[0, 0].set(1)

    # Only model_outputs[3] is consumed; fill the rest with placeholders.
    video = jax.random.normal(k4, (B, S, H, W, 3), dtype=jnp.float32)
    boxes = jnp.zeros((B, S, K, 4), dtype=jnp.float32)
    gt_flow = jnp.zeros((B, S, H, W, 3), dtype=jnp.float32)
    padding_mask = jnp.ones((B, S, H, W), dtype=jnp.float32)
    mask = jnp.ones((B, S), dtype=jnp.float32)
    model_outputs = (None, None, None, log_alpha_mask)
    batch = (video, boxes, segmentations, gt_flow, padding_mask, mask, label)

    loss, recon, focal = semi_loss(model_outputs, batch)
    loss = jax.block_until_ready(loss)

    ref = _reference_focal(log_alpha_mask, segmentations, label)
    np.testing.assert_allclose(np.asarray(loss), np.asarray(ref),
                               rtol=1e-5, atol=1e-5)
    print("KERNEL_OK")
</pallas_src>

<mosaic_0001>
module attributes {stable_mosaic.version = 11 : i64} {
  func.func @_focal_kernel(%arg0: i32, %arg1: memref<1xi32, #tpu.memory_space<smem>>, %arg2: memref<8x4x256xf32, #tpu.memory_space<vmem>>, %arg3: memref<8x256xi32, #tpu.memory_space<vmem>>, %arg4: memref<8x1xf32, #tpu.memory_space<vmem>>, %arg5: memref<1x1x128xf32, #tpu.memory_space<vmem>>) attributes {dimension_semantics = [#tpu.dimension_semantics<parallel>], iteration_bounds = array<i64: 1>, scalar_prefetch = 1 : i64, scratch_operands = 0 : i64, tpu.core_type = #tpu.core_type<tc>, window_params = [{transform_indices = @transform_0, window_bounds = array<i64: 8, 4, 256>}, {transform_indices = @transform_1, window_bounds = array<i64: 8, 256>}, {transform_indices = @transform_2, window_bounds = array<i64: 8, 1>}, {transform_indices = @transform_3, window_bounds = array<i64: 1, 1, 128>}]} {
    %0 = arith.index_cast %arg0 : i32 to index
    %1 = memref.load %arg1[%0] : memref<1xi32, #tpu.memory_space<smem>>
    %c0_i32 = arith.constant 0 : i32
    %2 = arith.cmpi ne, %1, %c0_i32 : i32
    %true = arith.constant true
    %3 = arith.xori %2, %true : i1
    %4 = arith.extui %3 : i1 to i32
    %c0_i32_0 = arith.constant 0 : i32
    %5 = arith.cmpi ne, %4, %c0_i32_0 : i32
    scf.if %5 {
      %cst = arith.constant 0.000000e+00 : f32
      %8 = vector.broadcast %cst : f32 to vector<1x1x128xf32>
      %c0 = arith.constant 0 : index
      %c0_2 = arith.constant 0 : index
      %c0_3 = arith.constant 0 : index
      %9 = vector.load %arg5[%c0, %c0_2, %c0_3] : memref<1x1x128xf32, #tpu.memory_space<vmem>>, vector<1x1x128xf32>
      tpu.vector_store %arg5[%c0, %c0_2, %c0_3], %8 {strides = array<i32>} : memref<1x1x128xf32, #tpu.memory_space<vmem>>, vector<1x1x128xf32>,
    } else {
    }
    %6 = arith.extui %2 : i1 to i32
    %c0_i32_1 = arith.constant 0 : i32
    %7 = arith.cmpi ne, %6, %c0_i32_1 : i32
    scf.if %7 {
      %c0 = arith.constant 0 : index
      %c0_2 = arith.constant 0 : index
      %c0_3 = arith.constant 0 : index
      %8 = vector.load %arg2[%c0, %c0_2, %c0_3] : memref<8x4x256xf32, #tpu.memory_space<vmem>>, vector<8x4x256xf32>
      %c0_4 = arith.constant 0 : index
      %c0_5 = arith.constant 0 : index
      %9 = vector.load %arg3[%c0_4, %c0_5] : memref<8x256xi32, #tpu.memory_space<vmem>>, vector<8x256xi32>
      %c0_6 = arith.constant 0 : index
      %c0_7 = arith.constant 0 : index
      %10 = vector.load %arg4[%c0_6, %c0_7] : memref<8x1xf32, #tpu.memory_space<vmem>>, vector<8x1xf32>
      %11 = tpu.iota {dimensions = array<i32: 1>} : vector<8x4x256xi32>
      %12 = vector.shape_cast %9 : vector<8x256xi32> to vector<8x1x256xi32>
      %13 = vector.broadcast %12 : vector<8x1x256xi32> to vector<8x4x256xi32>
      %14 = arith.cmpi eq, %11, %13 : vector<8x4x256xi32>
      %cst = arith.constant 0.000000e+00 : f32
      %15 = vector.broadcast %cst : f32 to vector<8x4x256xf32>
      %16 = arith.select %14, %8, %15 : vector<8x4x256xi1>, vector<8x4x256xf32>
      %cst_8 = arith.constant dense<0.000000e+00> : vector<8x256xf32>
      %17 = vector.multi_reduction <add>, %16, %cst_8 [1] : vector<8x4x256xf32> to vector<8x256xf32>
      %18 = math.exp %17 : vector<8x256xf32>
      %cst_9 = arith.constant 1.000000e+00 : f32
      %19 = vector.broadcast %cst_9 : f32 to vector<8x256xf32>
      %20 = arith.subf %19, %18 : vector<8x256xf32>
      %21 = arith.mulf %20, %20 : vector<8x256xf32>
      %22 = arith.mulf %21, %21 : vector<8x256xf32>
      %23 = arith.mulf %22, %21 : vector<8x256xf32>
      %24 = arith.mulf %23, %17 : vector<8x256xf32>
      %25 = vector.broadcast %10 : vector<8x1xf32> to vector<8x256xf32>
      %26 = arith.mulf %24, %25 : vector<8x256xf32>
      %27 = vector.shape_cast %26 : vector<8x256xf32> to vector<1x8x256xf32>
      %cst_10 = arith.constant dense<0.000000e+00> : vector<1xf32>
      %28 = vector.multi_reduction <add>, %27, %cst_10 [1, 2] : vector<1x8x256xf32> to vector<1xf32>
      %29 = vector.shape_cast %28 : vector<1xf32> to vector<1x1x1xf32>
      %30 = vector.extract %29[0, 0, 0] : f32 from vector<1x1x1xf32>
      %cst_11 = arith.constant 0.000000e+00 : f32
      %31 = arith.subf %cst_11, %30 : f32
      %32 = vector.broadcast %31 : f32 to vector<1x1x128xf32>
      %c0_12 = arith.constant 0 : index
      %c0_13 = arith.constant 0 : index
      %c0_14 = arith.constant 0 : index
      %33 = vector.load %arg5[%c0_12, %c0_13, %c0_14] : memref<1x1x128xf32, #tpu.memory_space<vmem>>, vector<1x1x128xf32>
      tpu.vector_store %arg5[%c0_12, %c0_13, %c0_14], %32 {strides = array<i32>} : memref<1x1x128xf32, #tpu.memory_space<vmem>>, vector<1x1x128xf32>,
    } else {
    }
    return
  }
  func.func @transform_0(%arg0: i32, %arg1: memref<1xi32, #tpu.memory_space<smem>>) -> (i32, i32, i32) {
    %c0_i32 = arith.constant 0 : i32
    %c0_i32_0 = arith.constant 0 : i32
    %c0_i32_1 = arith.constant 0 : i32
    return %arg0, %c0_i32, %c0_i32_0 : i32, i32, i32
  }
  func.func @transform_1(%arg0: i32, %arg1: memref<1xi32, #tpu.memory_space<smem>>) -> (i32, i32) {
    %c0_i32 = arith.constant 0 : i32
    %c0_i32_0 = arith.constant 0 : i32
    return %arg0, %c0_i32 : i32, i32
  }
  func.func @transform_2(%arg0: i32, %arg1: memref<1xi32, #tpu.memory_space<smem>>) -> (i32, i32) {
    %c0_i32 = arith.constant 0 : i32
    %c0_i32_0 = arith.constant 0 : i32
    return %arg0, %c0_i32 : i32, i32
  }
  func.func @transform_3(%arg0: i32, %arg1: memref<1xi32, #tpu.memory_space<smem>>) -> (i32, i32, i32) {
    %c0_i32 = arith.constant 0 : i32
    %c0_i32_0 = arith.constant 0 : i32
    %c0_i32_1 = arith.constant 0 : i32
    return %arg0, %c0_i32, %c0_i32_0 : i32, i32, i32
  }
}

</mosaic_0001>

<llo_original>
// kernel: tpu_custom_call.1
$region0: #{tpu_custom_call.1}
  #allocation0 [shape = 'u32[]', space=smem, size = 0x4, offset = 0x4, fixed_abs, tag = 'smem constant byte address 0x4 - core index']
  #allocation1 [shape = 'u32[72,128]{1,0:T(1,128)}', space=vmem, size = 0x9000, scoped, tag = 'internal scratch']
  #allocation2 [shape = 's32[1]{0}', space=sflag, size = 0x4, scoped, tag = 'scoped memory for tpu_custom_call.1']
  #allocation3 [shape = 's32[1]{0:T(128)S(6)}', space=smem, size = 0x200, scoped, tag = 'prefetched SMEM operand 0']
  %s0 = inlined_call_operand.<no memory space> [shape: s32[1], index: 0, kind: input, shape index: {}]
  %s1 = inlined_call_operand.hbm [shape: f32[8,4,256], index: 1, kind: input, shape index: {}]
  %s2 = inlined_call_operand.hbm [shape: s32[8,256], index: 2, kind: input, shape index: {}]
  %s3 = inlined_call_operand.vmem [shape: f32[8,1], index: 3, kind: input, shape index: {}]
  %s4 = inlined_call_operand.hbm [shape: f32[1,1,128], index: 4, kind: output, shape index: {}]
  %s5 = sld [smem:[#allocation0]]
  $region38: #{tpu_custom_call.1} parent=0
    _
  %s7 = ssub.s32 1, %s5
  %s8 = scalar_select 0, %s7, %s5
  %9 = sst [smem:[#allocation3]] %s0
  $region1: #{tpu_custom_call.1} parent=0
    #allocation4 [shape = 'u8[32768]{0}', space=vmem, size = 0x8000, scoped, tag = 'input window, operand 1, single buffered']
    #allocation5 [shape = 's32[1]{0}', space=sflag, size = 0x4, scoped, tag = 'scoped memory for tpu_custom_call.1']
    #allocation6 [shape = 's32[1]{0}', space=sflag, size = 0x4, scoped, tag = 'scoped memory for tpu_custom_call.1']
    #allocation7 [shape = 'u8[8192]{0}', space=vmem, size = 0x2000, scoped, tag = 'input window, operand 2, single buffered']
    #allocation8 [shape = 's32[1]{0}', space=sflag, size = 0x4, scoped, tag = 'scoped memory for tpu_custom_call.1']
    #allocation9 [shape = 'u8[512]{0}', space=vmem, size = 0x400, scoped, tag = 'output window, operand 0, single buffered']
    %10 = vsyncpa [#allocation5], 0
    %11 = vsyncpa [#allocation8], 0
    %12 = vsyncpa [#allocation6], 0
    // Predicated region
    $region2: #{tpu_custom_call.1} parent=1 // pred_check
      _
    $region3: #{tpu_custom_call.1} parent=1 // pred_check_branch
      %14 = sbr.rel (0) target = $region5
    $region4: #{tpu_custom_call.1} parent=1 // pred_region
      %16 = vsyncadd [#allocation5], 0
      %s17 = sshll.u32 %s1, 4
      %s18 = int_to_ptr.hbm [resolvable:$true] %s17
      %s19 = sshll.u32 [#allocation4], 4
      %s20 = int_to_ptr.vmem [resolvable:$true] %s19
      %25 = dma.hbm_to_vmem [thread:$0]  %s18, 1024, %s20, [#allocation5], 128, 128, 8
    $region5: #{tpu_custom_call.1} parent=1 // pred_fallthru
      _
    // Predicated region
    $region6: #{tpu_custom_call.1} parent=1 // pred_check
      _
    $region7: #{tpu_custom_call.1} parent=1 // pred_check_branch
      %27 = sbr.rel (0) target = $region9
    $region8: #{tpu_custom_call.1} parent=1 // pred_region
      %29 = vsyncadd [#allocation8], 0
      %s31 = sshll.u32 %s2, 4
      %s32 = int_to_ptr.hbm [resolvable:$true] %s31
      %s33 = sshll.u32 [#allocation7], 4
      %s34 = int_to_ptr.vmem [resolvable:$true] %s33
      %36 = dma.hbm_to_vmem [thread:$0]  %s32, 256, %s34, [#allocation8]
    $region9: #{tpu_custom_call.1} parent=1 // pred_fallthru
      _
    // Predicated region
    $region10: #{tpu_custom_call.1} parent=1 // pred_check
      _
    $region11: #{tpu_custom_call.1} parent=1 // pred_check_branch
      %38 = sbr.rel (0) target = $region13
    $region12: #{tpu_custom_call.1} parent=1 // pred_region
      _
    $region13: #{tpu_custom_call.1} parent=1 // pred_fallthru
      _
    // Predicated region
    $region14: #{tpu_custom_call.1} parent=1 // pred_check
      _
    $region15: #{tpu_custom_call.1} parent=1 // pred_check_branch
      %40 = sbr.rel (0) target = $region17
    $region16: #{tpu_custom_call.1} parent=1 // pred_region
      %42 = dma.done [#allocation5], 1024
    $region17: #{tpu_custom_call.1} parent=1 // pred_fallthru
      _
    // Predicated region
    $region18: #{tpu_custom_call.1} parent=1 // pred_check
      _
    $region19: #{tpu_custom_call.1} parent=1 // pred_check_branch
      %44 = sbr.rel (0) target = $region21
    $region20: #{tpu_custom_call.1} parent=1 // pred_region
      %46 = dma.done [#allocation8], 256
    $region21: #{tpu_custom_call.1} parent=1 // pred_fallthru
      _
    %s47 = sld [smem:[#allocation3]]
    %p48 = scmp.ne.s32.totalorder %s47, 0
    %p49 = scmp.eq.s32.totalorder %s47, 0
    // Predicated region
    $region22: #{tpu_custom_call.1} parent=1 // pred_check
      %p50 = pneg %p49
    $region23: #{tpu_custom_call.1} parent=1 // pred_check_branch
      %52 = sbr.rel (%p50) target = $region25
    $region24: #{tpu_custom_call.1} parent=1 // pred_region
      %53 = vst [vmem:[#allocation9] sm:$0x1] 0.0
    $region25: #{tpu_custom_call.1} parent=1 // pred_fallthru
      _
    // Predicated region
    $region26: #{tpu_custom_call.1} parent=1 // pred_check
      %p54 = pneg %p48
    $region27: #{tpu_custom_call.1} parent=1 // pred_check_branch
      %56 = sbr.rel (%p54) target = $region29
    $region28: #{tpu_custom_call.1} parent=1 // pred_region
      %v57 = vld [vmem:[#allocation4] sm:$0xff]
      %v58 = vld [vmem:[#allocation4 + $0x8] sm:$0xff]
      %v59 = vld [vmem:[#allocation4 + $0x10] sm:$0xff]
      %v60 = vld [vmem:[#allocation4 + $0x18] sm:$0xff]
      %v61 = vld [vmem:[#allocation4 + $0x20] sm:$0xff]
      %v62 = vld [vmem:[#allocation4 + $0x28] sm:$0xff]
      %v63 = vld [vmem:[#allocation4 + $0x30] sm:$0xff]
      %v64 = vld [vmem:[#allocation4 + $0x38] sm:$0xff]
      %v65 = vld [vmem:[#allocation7] sm:$0xff]
      %v66 = vld [vmem:[#allocation7 + $0x8] sm:$0xff]
      %v67 = vld [vmem:[%s3] sm:$0xff]
      %v68 = vlaneseq
      %v69 = vshrl.u32 %v68, 7
      %v70 = vrot.slane %v66, 7
      %vm71 = vcmask 1040384
      %v72 = vsel %vm71, %v65, %v70
      %vm73 = vcmask 1041409
      %v74 = vsel %vm73, %v65, %v70
      %v75 = vrot.slane %v74, 1
      %vm76 = vcmask 1042434
      %v77 = vsel %vm76, %v65, %v70
      %v78 = vrot.slane %v77, 2
      %vm79 = vcmask 1043459
      %v80 = vsel %vm79, %v65, %v70
      %v81 = vrot.slane %v80, 3
      %vm82 = vcmask 1044484
      %v83 = vsel %vm82, %v65, %v70
      %v84 = vrot.slane %v83, 4
      %vm85 = vcmask 1045509
      %v86 = vsel %vm85, %v65, %v70
      %v87 = vrot.slane %v86, 5
      %vm88 = vcmask 1046534
      %v89 = vsel %vm88, %v65, %v70
      %v90 = vrot.slane %v89, 6
      %vm91 = vcmask 1046528
      %v92 = vsel %vm91, %v70, %v65
      %v93 = vrot.slane %v92, 7
      %v94 = vperm.slane %v72, 0
      %v95 = vperm.slane %v72, 1
      %v96 = vperm.slane %v75, 0
      %v97 = vperm.slane %v75, 1
      %v98 = vperm.slane %v78, 0
      %v99 = vperm.slane %v78, 1
      %v100 = vperm.slane %v81, 0
      %v101 = vperm.slane %v81, 1
      %v102 = vperm.slane %v84, 0
      %v103 = vperm.slane %v84, 1
      %v104 = vperm.slane %v87, 0
      %v105 = vperm.slane %v87, 1
      %v106 = vperm.slane %v90, 0
      %v107 = vperm.slane %v90, 1
      %v108 = vperm.slane %v93, 0
      %v109 = vperm.slane %v93, 1
      %vm110 = vcmp.eq.s32.totalorder %v69, %v94
      %vm111 = vcmp.eq.s32.totalorder %v69, %v95
      %vm112 = vcmp.eq.s32.totalorder %v69, %v96
      %vm113 = vcmp.eq.s32.totalorder %v69, %v97
      %vm114 = vcmp.eq.s32.totalorder %v69, %v98
      %vm115 = vcmp.eq.s32.totalorder %v69, %v99
      %vm116 = vcmp.eq.s32.totalorder %v69, %v100
      %vm117 = vcmp.eq.s32.totalorder %v69, %v101
      %vm118 = vcmp.eq.s32.totalorder %v69, %v102
      %vm119 = vcmp.eq.s32.totalorder %v69, %v103
      %vm120 = vcmp.eq.s32.totalorder %v69, %v104
      %vm121 = vcmp.eq.s32.totalorder %v69, %v105
      %vm122 = vcmp.eq.s32.totalorder %v69, %v106
      %vm123 = vcmp.eq.s32.totalorder %v69, %v107
      %vm124 = vcmp.eq.s32.totalorder %v69, %v108
      %vm125 = vcmp.eq.s32.totalorder %v69, %v109
      %134 = vst [vmem:[#allocation1] ss:$2 sm:$0xff] %v57
      %v135 = vld.sshfl [vmem:[#allocation1] sm:$0xff pattern:$0x75316420]
      %v136 = vld.sshfl [vmem:[#allocation1 + $0x8] sm:$0xff pattern:$0x75316420]
      %s137 = scalar_lea.vmem [#allocation1], 16
      %138 = vst [vmem:[%s137] ss:$2 sm:$0xff] %v58
      %v139 = vld.sshfl [vmem:[#allocation1 + $0x10] sm:$0xff pattern:$0x75316420]
      %v140 = vld.sshfl [vmem:[#allocation1 + $0x18] sm:$0xff pattern:$0x75316420]
      %s141 = scalar_lea.vmem [#allocation1], 32
      %142 = vst [vmem:[%s141] ss:$2 sm:$0xff] %v59
      %v143 = vld.sshfl [vmem:[#allocation1 + $0x20] sm:$0xff pattern:$0x75316420]
      %v144 = vld.sshfl [vmem:[#allocation1 + $0x28] sm:$0xff pattern:$0x75316420]
      %s145 = scalar_lea.vmem [#allocation1], 48
      %146 = vst [vmem:[%s145] ss:$2 sm:$0xff] %v60
      %v147 = vld.sshfl [vmem:[#allocation1 + $0x30] sm:$0xff pattern:$0x75316420]
      %v148 = vld.sshfl [vmem:[#allocation1 + $0x38] sm:$0xff pattern:$0x75316420]
      %149 = vst [vmem:[#allocation1] ss:$2 sm:$0xff] %v61
      %v150 = vld.sshfl [vmem:[#allocation1] sm:$0xff pattern:$0x75316420]
      %v151 = vld.sshfl [vmem:[#allocation1 + $0x8] sm:$0xff pattern:$0x75316420]
      %152 = vst [vmem:[%s137] ss:$2 sm:$0xff] %v62
      %v153 = vld.sshfl [vmem:[#allocation1 + $0x10] sm:$0xff pattern:$0x75316420]
      %v154 = vld.sshfl [vmem:[#allocation1 + $0x18] sm:$0xff pattern:$0x75316420]
      %155 = vst [vmem:[%s141] ss:$2 sm:$0xff] %v63
      %v156 = vld.sshfl [vmem:[#allocation1 + $0x20] sm:$0xff pattern:$0x75316420]
      %v157 = vld.sshfl [vmem:[#allocation1 + $0x28] sm:$0xff pattern:$0x75316420]
      %158 = vst [vmem:[%s145] ss:$2 sm:$0xff] %v64
      %v159 = vld.sshfl [vmem:[#allocation1 + $0x30] sm:$0xff pattern:$0x75316420]
      %v160 = vld.sshfl [vmem:[#allocation1 + $0x38] sm:$0xff pattern:$0x75316420]
      %v177 = vsel %vm110, %v135, 0.0
      %v178 = vsel %vm111, %v136, 0.0
      %v179 = vsel %vm112, %v139, 0.0
      %v180 = vsel %vm113, %v140, 0.0
      %v181 = vsel %vm114, %v143, 0.0
      %v182 = vsel %vm115, %v144, 0.0
      %v183 = vsel %vm116, %v147, 0.0
      %v184 = vsel %vm117, %v148, 0.0
      %v185 = vsel %vm118, %v150, 0.0
      %v186 = vsel %vm119, %v151, 0.0
      %v187 = vsel %vm120, %v153, 0.0
      %v188 = vsel %vm121, %v154, 0.0
      %v189 = vsel %vm122, %v156, 0.0
      %v190 = vsel %vm123, %v157, 0.0
      %v191 = vsel %vm124, %v159, 0.0
      %v192 = vsel %vm125, %v160, 0.0
      %vm193 = vcmask 1043456
      %v194 = vsel %vm193, %v177, 0.0
      %v195 = vrot.slane %v194, 4
      %v196 = vadd.f32 %v194, %v195
      %v197 = vrot.slane %v196, 2
      %v198 = vadd.f32 %v196, %v197
      %v199 = vrot.slane %v198, 1
      %v200 = vadd.f32 %v198, %v199
      %v201 = vsel %vm193, %v178, 0.0
      %v202 = vrot.slane %v201, 4
      %v203 = vadd.f32 %v201, %v202
      %v204 = vrot.slane %v203, 2
      %v205 = vadd.f32 %v203, %v204
      %v206 = vrot.slane %v205, 1
      %v207 = vadd.f32 %v205, %v206
      %v208 = vsel %vm193, %v179, 0.0
      %v209 = vrot.slane %v208, 4
      %v210 = vadd.f32 %v208, %v209
      %v211 = vrot.slane %v210, 2
      %v212 = vadd.f32 %v210, %v211
      %v213 = vrot.slane %v212, 1
      %v214 = vadd.f32 %v212, %v213
      %v215 = vsel %vm193, %v180, 0.0
      %v216 = vrot.slane %v215, 4
      %v217 = vadd.f32 %v215, %v216
      %v218 = vrot.slane %v217, 2
      %v219 = vadd.f32 %v217, %v218
      %v220 = vrot.slane %v219, 1
      %v221 = vadd.f32 %v219, %v220
      %v222 = vsel %vm193, %v181, 0.0
      %v223 = vrot.slane %v222, 4
      %v224 = vadd.f32 %v222, %v223
      %v225 = vrot.slane %v224, 2
      %v226 = vadd.f32 %v224, %v225
      %v227 = vrot.slane %v226, 1
      %v228 = vadd.f32 %v226, %v227
      %v229 = vsel %vm193, %v182, 0.0
      %v230 = vrot.slane %v229, 4
      %v231 = vadd.f32 %v229, %v230
      %v232 = vrot.slane %v231, 2
      %v233 = vadd.f32 %v231, %v232
      %v234 = vrot.slane %v233, 1
      %v235 = vadd.f32 %v233, %v234
      %v236 = vsel %vm193, %v183, 0.0
      %v237 = vrot.slane %v236, 4
      %v238 = vadd.f32 %v236, %v237
      %v239 = vrot.slane %v238, 2
      %v240 = vadd.f32 %v238, %v239
      %v241 = vrot.slane %v240, 1
      %v242 = vadd.f32 %v240, %v241
      %v243 = vsel %vm193, %v184, 0.0
      %v244 = vrot.slane %v243, 4
      %v245 = vadd.f32 %v243, %v244
      %v246 = vrot.slane %v245, 2
      %v247 = vadd.f32 %v245, %v246
      %v248 = vrot.slane %v247, 1
      %v249 = vadd.f32 %v247, %v248
      %v250 = vsel %vm193, %v185, 0.0
      %v251 = vrot.slane %v250, 4
      %v252 = vadd.f32 %v250, %v251
      %v253 = vrot.slane %v252, 2
      %v254 = vadd.f32 %v252, %v253
      %v255 = vrot.slane %v254, 1
      %v256 = vadd.f32 %v254, %v255
      %v257 = vsel %vm193, %v186, 0.0
      %v258 = vrot.slane %v257, 4
      %v259 = vadd.f32 %v257, %v258
      %v260 = vrot.slane %v259, 2
      %v261 = vadd.f32 %v259, %v260
      %v262 = vrot.slane %v261, 1
      %v263 = vadd.f32 %v261, %v262
      %v264 = vsel %vm193, %v187, 0.0
      %v265 = vrot.slane %v264, 4
      %v266 = vadd.f32 %v264, %v265
      %v267 = vrot.slane %v266, 2
      %v268 = vadd.f32 %v266, %v267
      %v269 = vrot.slane %v268, 1
      %v270 = vadd.f32 %v268, %v269
      %v271 = vsel %vm193, %v188, 0.0
      %v272 = vrot.slane %v271, 4
      %v273 = vadd.f32 %v271, %v272
      %v274 = vrot.slane %v273, 2
      %v275 = vadd.f32 %v273, %v274
      %v276 = vrot.slane %v275, 1
      %v277 = vadd.f32 %v275, %v276
      %v278 = vsel %vm193, %v189, 0.0
      %v279 = vrot.slane %v278, 4
      %v280 = vadd.f32 %v278, %v279
      %v281 = vrot.slane %v280, 2
      %v282 = vadd.f32 %v280, %v281
      %v283 = vrot.slane %v282, 1
      %v284 = vadd.f32 %v282, %v283
      %v285 = vsel %vm193, %v190, 0.0
      %v286 = vrot.slane %v285, 4
      %v287 = vadd.f32 %v285, %v286
      %v288 = vrot.slane %v287, 2
      %v289 = vadd.f32 %v287, %v288
      %v290 = vrot.slane %v289, 1
      %v291 = vadd.f32 %v289, %v290
      %v292 = vsel %vm193, %v191, 0.0
      %v293 = vrot.slane %v292, 4
      %v294 = vadd.f32 %v292, %v293
      %v295 = vrot.slane %v294, 2
      %v296 = vadd.f32 %v294, %v295
      %v297 = vrot.slane %v296, 1
      %v298 = vadd.f32 %v296, %v297
      %v299 = vsel %vm193, %v192, 0.0
      %v300 = vrot.slane %v299, 4
      %v301 = vadd.f32 %v299, %v300
      %v302 = vrot.slane %v301, 2
      %v303 = vadd.f32 %v301, %v302
      %v304 = vrot.slane %v303, 1
      %v305 = vadd.f32 %v303, %v304
      %v306 = vmul.f32 %v200, 1.442695
      %v307 = vpow.pop %v306
      %v308 = vmul.f32 %v207, 1.442695
      %v309 = vpow.pop %v308
      %v310 = vmul.f32 %v214, 1.442695
      %v311 = vpow.pop %v310
      %v312 = vmul.f32 %v221, 1.442695
      %v313 = vpow.pop %v312
      %v314 = vmul.f32 %v228, 1.442695
      %v315 = vpow.pop %v314
      %v316 = vmul.f32 %v235, 1.442695
      %v317 = vpow.pop %v316
      %v318 = vmul.f32 %v242, 1.442695
      %v319 = vpow.pop %v318
      %v320 = vmul.f32 %v249, 1.442695
      %v321 = vpow.pop %v320
      %v322 = vmul.f32 %v256, 1.442695
      %v323 = vpow.pop %v322
      %v324 = vmul.f32 %v263, 1.442695
      %v325 = vpow.pop %v324
      %v326 = vmul.f32 %v270, 1.442695
      %v327 = vpow.pop %v326
      %v328 = vmul.f32 %v277, 1.442695
      %v329 = vpow.pop %v328
      %v330 = vmul.f32 %v284, 1.442695
      %v331 = vpow.pop %v330
      %v332 = vmul.f32 %v291, 1.442695
      %v333 = vpow.pop %v332
      %v334 = vmul.f32 %v298, 1.442695
      %v335 = vpow.pop %v334
      %v336 = vmul.f32 %v305, 1.442695
      %v337 = vpow.pop %v336
      %v338 = vsub.f32 1.0, %v307
      %v339 = vsub.f32 1.0, %v309
      %v340 = vsub.f32 1.0, %v311
      %v341 = vsub.f32 1.0, %v313
      %v342 = vsub.f32 1.0, %v315
      %v343 = vsub.f32 1.0, %v317
      %v344 = vsub.f32 1.0, %v319
      %v345 = vsub.f32 1.0, %v321
      %v346 = vsub.f32 1.0, %v323
      %v347 = vsub.f32 1.0, %v325
      %v348 = vsub.f32 1.0, %v327
      %v349 = vsub.f32 1.0, %v329
      %v350 = vsub.f32 1.0, %v331
      %v351 = vsub.f32 1.0, %v333
      %v352 = vsub.f32 1.0, %v335
      %v353 = vsub.f32 1.0, %v337
      %v354 = vmul.f32 %v338, %v338
      %v355 = vmul.f32 %v339, %v339
      %v356 = vmul.f32 %v340, %v340
      %v357 = vmul.f32 %v341, %v341
      %v358 = vmul.f32 %v342, %v342
      %v359 = vmul.f32 %v343, %v343
      %v360 = vmul.f32 %v344, %v344
      %v361 = vmul.f32 %v345, %v345
      %v362 = vmul.f32 %v346, %v346
      %v363 = vmul.f32 %v347, %v347
      %v364 = vmul.f32 %v348, %v348
      %v365 = vmul.f32 %v349, %v349
      %v366 = vmul.f32 %v350, %v350
      %v367 = vmul.f32 %v351, %v351
      %v368 = vmul.f32 %v352, %v352
      %v369 = vmul.f32 %v353, %v353
      %v370 = vmul.f32 %v354, %v354
      %v371 = vmul.f32 %v355, %v355
      %v372 = vmul.f32 %v356, %v356
      %v373 = vmul.f32 %v357, %v357
      %v374 = vmul.f32 %v358, %v358
      %v375 = vmul.f32 %v359, %v359
      %v376 = vmul.f32 %v360, %v360
      %v377 = vmul.f32 %v361, %v361
      %v378 = vmul.f32 %v362, %v362
      %v379 = vmul.f32 %v363, %v363
      %v380 = vmul.f32 %v364, %v364
      %v381 = vmul.f32 %v365, %v365
      %v382 = vmul.f32 %v366, %v366
      %v383 = vmul.f32 %v367, %v367
      %v384 = vmul.f32 %v368, %v368
      %v385 = vmul.f32 %v369, %v369
      %v386 = vmul.f32 %v370, %v354
      %v387 = vmul.f32 %v371, %v355
      %v388 = vmul.f32 %v372, %v356
      %v389 = vmul.f32 %v373, %v357
      %v390 = vmul.f32 %v374, %v358
      %v391 = vmul.f32 %v375, %v359
      %v392 = vmul.f32 %v376, %v360
      %v393 = vmul.f32 %v377, %v361
      %v394 = vmul.f32 %v378, %v362
      %v395 = vmul.f32 %v379, %v363
      %v396 = vmul.f32 %v380, %v364
      %v397 = vmul.f32 %v381, %v365
      %v398 = vmul.f32 %v382, %v366
      %v399 = vmul.f32 %v383, %v367
      %v400 = vmul.f32 %v384, %v368
      %v401 = vmul.f32 %v385, %v369
      %v402 = vmul.f32 %v386, %v200
      %v403 = vmul.f32 %v387, %v207
      %v404 = vmul.f32 %v388, %v214
      %v405 = vmul.f32 %v389, %v221
      %v406 = vmul.f32 %v390, %v228
      %v407 = vmul.f32 %v391, %v235
      %v408 = vmul.f32 %v392, %v242
      %v409 = vmul.f32 %v393, %v249
      %v410 = vmul.f32 %v394, %v256
      %v411 = vmul.f32 %v395, %v263
      %v412 = vmul.f32 %v396, %v270
      %v413 = vmul.f32 %v397, %v277
      %v414 = vmul.f32 %v398, %v284
      %v415 = vmul.f32 %v399, %v291
      %v416 = vmul.f32 %v400, %v298
      %v417 = vmul.f32 %v401, %v305
      %419 = vset.pattern.permute.xlu0 0
      %420 = vperm.xlu0 %419, %v67
      %v421 = vpop.permute.xlu0 %420
      %v422 = vrot.slane %v421, 1
      %v423 = vrot.slane %v421, 2
      %v424 = vrot.slane %v421, 3
      %v425 = vrot.slane %v421, 4
      %v426 = vrot.slane %v421, 5
      %v427 = vrot.slane %v421, 6
      %v428 = vrot.slane %v421, 7
      %v437 = vmul.f32 %v402, %v421
      %v438 = vmul.f32 %v403, %v421
      %v439 = vmul.f32 %v404, %v422
      %v440 = vmul.f32 %v405, %v422
      %v441 = vmul.f32 %v406, %v423
      %v442 = vmul.f32 %v407, %v423
      %v443 = vmul.f32 %v408, %v424
      %v444 = vmul.f32 %v409, %v424
      %v445 = vmul.f32 %v410, %v425
      %v446 = vmul.f32 %v411, %v425
      %v447 = vmul.f32 %v412, %v426
      %v448 = vmul.f32 %v413, %v426
      %v449 = vmul.f32 %v414, %v427
      %v450 = vmul.f32 %v415, %v427
      %v451 = vmul.f32 %v416, %v428
      %v452 = vmul.f32 %v417, %v428
      %v469 = vrot.slane %v439, 7
      %v470 = vsel %vm73, %v469, %v437
      %v471 = vrot.slane %v441, 6
      %v472 = vsel %vm76, %v471, %v470
      %v473 = vrot.slane %v443, 5
      %v474 = vsel %vm79, %v473, %v472
      %v475 = vrot.slane %v445, 4
      %v476 = vsel %vm82, %v475, %v474
      %v477 = vrot.slane %v447, 3
      %v478 = vsel %vm85, %v477, %v476
      %v479 = vrot.slane %v449, 2
      %v480 = vsel %vm88, %v479, %v478
      %v481 = vrot.slane %v451, 1
      %vm482 = vcmask 1047559
      %v483 = vsel %vm482, %v481, %v480
      %v484 = vrot.slane %v440, 7
      %v485 = vsel %vm73, %v484, %v438
      %v486 = vrot.slane %v442, 6
      %v487 = vsel %vm76, %v486, %v485
      %v488 = vrot.slane %v444, 5
      %v489 = vsel %vm79, %v488, %v487
      %v490 = vrot.slane %v446, 4
      %v491 = vsel %vm82, %v490, %v489
      %v492 = vrot.slane %v448, 3
      %v493 = vsel %vm85, %v492, %v491
      %v494 = vrot.slane %v450, 2
      %v495 = vsel %vm88, %v494, %v493
      %v496 = vrot.slane %v452, 1
      %v497 = vsel %vm482, %v496, %v495
      %v500 = vadd.f32 %v483, %v497
      %501 = vadd.xlane.f32.xlu0 %v500
      %v502 = vpop.xlane.xlu0 %501
      %v503 = vrot.slane %v502, 4
      %v504 = vadd.f32 %v502, %v503
      %v505 = vrot.slane %v504, 2
      %v506 = vadd.f32 %v504, %v505
      %v507 = vrot.slane %v506, 1
      %v508 = vadd.f32 %v506, %v507
      %s509 = vtos %v508
      %s510 = ssub.f32 0.0, %s509
      %v511 = vstv %s510
      %512 = vst [vmem:[#allocation9] sm:$0x1] %v511
    $region29: #{tpu_custom_call.1} parent=1 // pred_fallthru
      _
    // Predicated region
    $region30: #{tpu_custom_call.1} parent=1 // pred_check
      _
    $region31: #{tpu_custom_call.1} parent=1 // pred_check_branch
      %514 = sbr.rel (0) target = $region33
    $region32: #{tpu_custom_call.1} parent=1 // pred_region
      %516 = vsyncadd [#allocation6], 0
      %s518 = sshll.u32 [#allocation9], 4
      %s519 = int_to_ptr.vmem [resolvable:$true] %s518
      %s520 = sshll.u32 %s4, 4
      %s521 = int_to_ptr.hbm [resolvable:$true] %s520
      %523 = dma.vmem_to_hbm [thread:$0]  %s519, 16, %s521, [#allocation6]
    $region33: #{tpu_custom_call.1} parent=1 // pred_fallthru
      _
    // Predicated region
    $region34: #{tpu_custom_call.1} parent=1 // pred_check
      _
    $region35: #{tpu_custom_call.1} parent=1 // pred_check_branch
      %525 = sbr.rel (0) target = $region37
    $region36: #{tpu_custom_call.1} parent=1 // pred_region
      %527 = dma.done [#allocation6], 16
    $region37: #{tpu_custom_call.1} parent=1 // pred_fallthru
      _
    %528 = vsyncpa [#allocation5], 1
    %529 = vsyncpa [#allocation8], 1
    %530 = vsyncpa [#allocation6], 1

</llo_original>
